<compile_context>
chip_gen: v6e
topology: v6e:2x2x1
jax: 0.10.0
libtpu: 0.0.40
codegen_flags: <defaults>
</compile_context>

<pallas_src>
import functools

import jax
import jax.numpy as jnp
import numpy as np
from jax.experimental import pallas as pl
from jax.experimental.pallas import tpu as pltpu


def _round_up(x, m):
    return ((x + m - 1) // m) * m


def _focal_loss_kernel(pred_ref, label_ref, out_ref, *, n_rows, gamma, alpha,
                       sub_n, needs_mask):
    """One grid step: (tile_n, C) slab -> (8, C) partial sums.

    The elementwise chain is evaluated on sub_n-row sub-slabs inside a
    fori_loop so VMEM temporaries stay bounded while the DMA block is large.
    """
    tile_n, c = pred_ref.shape
    n_sub = tile_n // sub_n
    base = pl.program_id(0) * tile_n

    if needs_mask:
        # Hoisted once per grid step (JAX does not CSE broadcasts).
        row_ids = jax.lax.broadcasted_iota(jnp.int32, (sub_n, c), 0)
        rows_left0 = n_rows - base          # valid rows remaining at block start

    one_minus_alpha = 1.0 - float(alpha)
    two_alpha_minus_one = 2.0 * float(alpha) - 1.0

    def body(s, acc):
        off = pl.multiple_of(s * sub_n, sub_n)
        x = pred_ref[pl.ds(off, sub_n), :].astype(jnp.float32)
        y = label_ref[pl.ds(off, sub_n), :].astype(jnp.float32)

        # Shared transcendental: e = exp(-|x|) feeds the stable-BCE log term
        # and the sigmoid.
        e = jnp.exp(-jnp.abs(x))
        d = 1.0 + e
        # EUP approx reciprocal + one Newton step (~f32 accuracy) instead of a
        # VALU-heavy f32 divide.
        r = pl.reciprocal(d, approx=True)
        r = r * (2.0 - d * r)
        er = e * r

        # Numerically-stable BCE-with-logits, reduction='none':
        #   max(x, 0) - x*y + log(1 + exp(-|x|))     (log reuses d = 1 + e)
        bce = jnp.maximum(x, 0.0) - x * y + jnp.log(d)

        nonneg = x >= 0.0
        p = jnp.where(nonneg, r, er)        # sigmoid(x)
        q = jnp.where(nonneg, er, r)        # 1 - sigmoid(x)

        # 1 - p_t = y*(1-p) + (1-y)*p = p + y*(q - p)
        t = p + y * (q - p)
        t = jnp.maximum(t, 0.0)             # guard sqrt/pow against tiny negatives
        if gamma == 1.5:
            mod = t * jnp.sqrt(t)           # t**1.5 without exp/log
        elif gamma == 2.0:
            mod = t * t
        elif gamma == 1.0:
            mod = t
        else:
            # TODO(synk): generic pow NaNs for gamma <= 0 at t == 0; default
            # ultralytics gammas (>0) are fine.
            mod = jnp.power(t, gamma)

        loss = bce * mod
        if alpha > 0:
            # y*alpha + (1-y)*(1-alpha) == (1-alpha) + y*(2*alpha - 1)
            loss = loss * (one_minus_alpha + y * two_alpha_minus_one)

        if needs_mask:
            # Rows past N (only possible in the last grid block) contribute 0.
            loss = jnp.where(row_ids < (rows_left0 - off), loss, 0.0)

        # Fold rows in groups of 8 (pure VPU adds over vreg groups; no XLU,
        # no SMEM scalar accumulator).  Final reduction happens in the wrapper.
        return acc + jnp.sum(loss.reshape(sub_n // 8, 8, c), axis=0)

    acc = jax.lax.fori_loop(0, n_sub, body,
                            jnp.zeros((8, c), jnp.float32),
                            unroll=min(2, n_sub))
    out_ref[...] = acc


def focal_loss(pred, label, gamma=1.5, alpha=0.25, *, tile_n=None, sub_n=256):
    """Pallas TPU implementation of ultralytics FocalLoss.forward."""
    assert pred.shape == label.shape and pred.ndim == 2
    n, c = pred.shape

    if tile_n is None:
        # ~2 MiB per input block (good on v5e/v6e/v7x), capped at 4096 rows and
        # at ceil(N/2) rows so small problems still yield >= 2 "parallel" grid
        # blocks (keeps both v7x TensorCores busy).
        budget_rows = max(8, (2 * 1024 * 1024) // (c * 4))
        half = _round_up(pl.cdiv(n, 2), 8)
        tile_n = max(8, min(budget_rows, half, 4096))
    tile_n = max(8, _round_up(int(tile_n), 8))
    sub_n = max(8, (min(int(sub_n), tile_n) // 8) * 8)
    tile_n = _round_up(tile_n, sub_n)            # tile_n is a multiple of sub_n

    num_blocks = pl.cdiv(n, tile_n)
    needs_mask = (n % tile_n) != 0               # static: masking compiled in only if needed
    # TODO(synk): when C % 128 != 0 (e.g. YOLO C=80) a flattened lane-dense
    # layout would recover ~1.6x; current path is correct but lane-sparse there.

    kernel = functools.partial(
        _focal_loss_kernel, n_rows=int(n), gamma=float(gamma),
        alpha=float(alpha), sub_n=int(sub_n), needs_mask=bool(needs_mask))

    in_bytes = n * c * (pred.dtype.itemsize + label.dtype.itemsize)
    out_bytes = num_blocks * 8 * c * 4
    cost = pl.CostEstimate(flops=26 * n * c,
                           transcendentals=4 * n * c,
                           bytes_accessed=in_bytes + out_bytes)

    partials = pl.pallas_call(
        kernel,
        out_shape=jax.ShapeDtypeStruct((num_blocks * 8, c), jnp.float32),
        grid_spec=pltpu.PrefetchScalarGridSpec(
            num_scalar_prefetch=0,
            grid=(num_blocks,),
            in_specs=[
                pl.BlockSpec((tile_n, c), lambda i: (i, 0)),
                pl.BlockSpec((tile_n, c), lambda i: (i, 0)),
            ],
            out_specs=pl.BlockSpec((8, c), lambda i: (i, 0)),
        ),
        compiler_params=pltpu.CompilerParams(
            # Independent row blocks -> shardable across TensorCores on v7x.
            dimension_semantics=("parallel",),
            vmem_limit_bytes=32 * 1024 * 1024,
        ),
        cost_estimate=cost,
    )(pred, label)

    # Tiny final reduction + mean-over-classes scaling in plain JAX.
    return jnp.sum(partials) * jnp.float32(1.0 / c)


def _focal_loss_ref(pred, label, gamma=1.5, alpha=0.25):
    """Pure-JAX reference mirroring the PyTorch module."""
    pred = pred.astype(jnp.float32)
    label = label.astype(jnp.float32)
    bce = jnp.maximum(pred, 0.0) - pred * label + jnp.log1p(jnp.exp(-jnp.abs(pred)))
    p = jax.nn.sigmoid(pred)
    p_t = label * p + (1 - label) * (1 - p)
    loss = bce * (1.0 - p_t) ** gamma
    if alpha > 0:
        loss = loss * (label * alpha + (1 - label) * (1 - alpha))
    return loss.mean(1).sum()


if __name__ == "__main__":
    key = jax.random.PRNGKey(0)
    keys = jax.random.split(key, 6)

    # Small, module-consistent shapes: (num_anchors, num_classes).
    N, C = 16, 128
    pred = jax.random.normal(keys[0], (N, C), dtype=jnp.float32) * 2.0
    label = (jax.random.uniform(keys[1], (N, C)) > 0.9).astype(jnp.float32)
    out = jax.block_until_ready(focal_loss(pred, label, gamma=1.5, alpha=0.25))
    ref = _focal_loss_ref(pred, label, gamma=1.5, alpha=0.25)
    np.testing.assert_allclose(np.asarray(out), np.asarray(ref),
                               rtol=1e-4, atol=1e-6)

    # Exercise the in-kernel row-masking path (N not a multiple of tile_n).
    N2 = 50
    pred2 = jax.random.normal(keys[2], (N2, C), dtype=jnp.float32) * 2.0
    label2 = (jax.random.uniform(keys[3], (N2, C)) > 0.9).astype(jnp.float32)
    out2 = jax.block_until_ready(focal_loss(pred2, label2))
    ref2 = _focal_loss_ref(pred2, label2)
    np.testing.assert_allclose(np.asarray(out2), np.asarray(ref2),
                               rtol=1e-4, atol=1e-6)

    # Exercise the multi-sub-slab fori_loop + masking path.
    N3 = 600
    pred3 = jax.random.normal(keys[4], (N3, C), dtype=jnp.float32) * 2.0
    label3 = (jax.random.uniform(keys[5], (N3, C)) > 0.9).astype(jnp.float32)
    out3 = jax.block_until_ready(focal_loss(pred3, label3))
    ref3 = _focal_loss_ref(pred3, label3)
    np.testing.assert_allclose(np.asarray(out3), np.asarray(ref3),
                               rtol=1e-4, atol=1e-6)

    print("KERNEL_OK")
</pallas_src>

<mosaic_0001>
module attributes {stable_mosaic.version = 11 : i64} {
  func.func @_focal_loss_kernel(%arg0: i32, %arg1: memref<8x128xf32, #tpu.memory_space<vmem>>, %arg2: memref<8x128xf32, #tpu.memory_space<vmem>>, %arg3: memref<8x128xf32, #tpu.memory_space<vmem>>) attributes {dimension_semantics = [#tpu.dimension_semantics<parallel>], iteration_bounds = array<i64: 2>, scalar_prefetch = 0 : i64, scratch_operands = 0 : i64, tpu.core_type = #tpu.core_type<tc>, window_params = [{transform_indices = @transform_0, window_bounds = array<i64: 8, 128>}, {transform_indices = @transform_1, window_bounds = array<i64: 8, 128>}, {transform_indices = @transform_2, window_bounds = array<i64: 8, 128>}]} {
    %cst = arith.constant 0.000000e+00 : f32
    %0 = vector.broadcast %cst : f32 to vector<8x128xf32>
    %c0_i32 = arith.constant 0 : i32
    %c8_i32 = arith.constant 8 : i32
    %1 = arith.muli %c0_i32, %c8_i32 : i32
    %2 = tpu.assume_multiple %1, 8 : i32
    %3 = arith.index_cast %2 : i32 to index
    %c0 = arith.constant 0 : index
    %4 = vector.load %arg1[%3, %c0] : memref<8x128xf32, #tpu.memory_space<vmem>>, vector<8x128xf32>
    %5 = arith.index_cast %2 : i32 to index
    %c0_0 = arith.constant 0 : index
    %6 = vector.load %arg2[%5, %c0_0] : memref<8x128xf32, #tpu.memory_space<vmem>>, vector<8x128xf32>
    %7 = math.absf %4 : vector<8x128xf32>
    %cst_1 = arith.constant 0.000000e+00 : f32
    %8 = vector.broadcast %cst_1 : f32 to vector<8x128xf32>
    %9 = arith.subf %8, %7 : vector<8x128xf32>
    %10 = math.exp %9 : vector<8x128xf32>
    %cst_2 = arith.constant 1.000000e+00 : f32
    %11 = vector.broadcast %cst_2 : f32 to vector<8x128xf32>
    %12 = arith.addf %11, %10 : vector<8x128xf32>
    %13 = tpu.reciprocal %12 {approx = true} : vector<8x128xf32> -> vector<8x128xf32>
    %14 = arith.mulf %12, %13 : vector<8x128xf32>
    %cst_3 = arith.constant 2.000000e+00 : f32
    %15 = vector.broadcast %cst_3 : f32 to vector<8x128xf32>
    %16 = arith.subf %15, %14 : vector<8x128xf32>
    %17 = arith.mulf %13, %16 : vector<8x128xf32>
    %18 = arith.mulf %10, %17 : vector<8x128xf32>
    %cst_4 = arith.constant 0.000000e+00 : f32
    %19 = vector.broadcast %cst_4 : f32 to vector<8x128xf32>
    %20 = arith.maximumf %4, %19 : vector<8x128xf32>
    %21 = arith.mulf %4, %6 : vector<8x128xf32>
    %22 = arith.subf %20, %21 : vector<8x128xf32>
    %23 = math.log %12 : vector<8x128xf32>
    %24 = arith.addf %22, %23 : vector<8x128xf32>
    %cst_5 = arith.constant 0.000000e+00 : f32
    %25 = vector.broadcast %cst_5 : f32 to vector<8x128xf32>
    %26 = arith.cmpf oge, %4, %25 : vector<8x128xf32>
    %27 = arith.select %26, %17, %18 : vector<8x128xi1>, vector<8x128xf32>
    %28 = arith.select %26, %18, %17 : vector<8x128xi1>, vector<8x128xf32>
    %29 = arith.subf %28, %27 : vector<8x128xf32>
    %30 = arith.mulf %6, %29 : vector<8x128xf32>
    %31 = arith.addf %27, %30 : vector<8x128xf32>
    %cst_6 = arith.constant 0.000000e+00 : f32
    %32 = vector.broadcast %cst_6 : f32 to vector<8x128xf32>
    %33 = arith.maximumf %31, %32 : vector<8x128xf32>
    %34 = math.sqrt %33 : vector<8x128xf32>
    %35 = arith.mulf %33, %34 : vector<8x128xf32>
    %36 = arith.mulf %24, %35 : vector<8x128xf32>
    %cst_7 = arith.constant -5.000000e-01 : f32
    %37 = vector.broadcast %cst_7 : f32 to vector<8x128xf32>
    %38 = arith.mulf %6, %37 : vector<8x128xf32>
    %cst_8 = arith.constant 7.500000e-01 : f32
    %39 = vector.broadcast %cst_8 : f32 to vector<8x128xf32>
    %40 = arith.addf %39, %38 : vector<8x128xf32>
    %41 = arith.mulf %36, %40 : vector<8x128xf32>
    %42 = vector.shape_cast %41 : vector<8x128xf32> to vector<1x8x128xf32>
    %cst_9 = arith.constant dense<0.000000e+00> : vector<8x128xf32>
    %43 = vector.multi_reduction <add>, %42, %cst_9 [0] : vector<1x8x128xf32> to vector<8x128xf32>
    %44 = arith.addf %0, %43 : vector<8x128xf32>
    %c1_i32 = arith.constant 1 : i32
    %c0_10 = arith.constant 0 : index
    %c0_11 = arith.constant 0 : index
    %45 = vector.load %arg3[%c0_10, %c0_11] : memref<8x128xf32, #tpu.memory_space<vmem>>, vector<8x128xf32>
    tpu.vector_store %arg3[%c0_10, %c0_11], %44 {strides = array<i32>} : memref<8x128xf32, #tpu.memory_space<vmem>>, vector<8x128xf32>,
    return
  }
  func.func @transform_0(%arg0: i32) -> (i32, i32) {
    %c0_i32 = arith.constant 0 : i32
    %c0_i32_0 = arith.constant 0 : i32
    return %arg0, %c0_i32 : i32, i32
  }
  func.func @transform_1(%arg0: i32) -> (i32, i32) {
    %c0_i32 = arith.constant 0 : i32
    %c0_i32_0 = arith.constant 0 : i32
    return %arg0, %c0_i32 : i32, i32
  }
  func.func @transform_2(%arg0: i32) -> (i32, i32) {
    %c0_i32 = arith.constant 0 : i32
    %c0_i32_0 = arith.constant 0 : i32
    return %arg0, %c0_i32 : i32, i32
  }
}

</mosaic_0001>

<llo_original>
// kernel: tpu_custom_call.1
$region0: #{tpu_custom_call.1}
  #allocation0 [shape = 'u32[]', space=smem, size = 0x4, offset = 0x4, fixed_abs, tag = 'smem constant byte address 0x4 - core index']
  #allocation1 [shape = 'u32[144,128]{1,0:T(1,128)}', space=vmem, size = 0x12000, scoped, tag = 'internal scratch']
  %s0 = inlined_call_operand.hbm [shape: f32[16,128], index: 0, kind: input, shape index: {}]
  %s1 = inlined_call_operand.hbm [shape: f32[16,128], index: 1, kind: input, shape index: {}]
  %s2 = inlined_call_operand.hbm [shape: f32[16,128], index: 2, kind: output, shape index: {}]
  %s3 = sld [smem:[#allocation0]]
  $region49: #{tpu_custom_call.1} parent=0
    _
  %s5 = ssub.s32 1, %s3
  %s6 = scalar_select 0, %s5, %s3
  $region1: #{tpu_custom_call.1} parent=0
    #allocation2 [shape = 'u8[8192]{0}', space=vmem, size = 0x2000, scoped, tag = 'input window, operand 0']
    #allocation3 [shape = 's32[2]{0}', space=sflag, size = 0x8, scoped, tag = 'scoped memory for tpu_custom_call.1']
    #allocation4 [shape = 's32[2]{0}', space=sflag, size = 0x8, scoped, tag = 'scoped memory for tpu_custom_call.1']
    #allocation5 [shape = 'u8[8192]{0}', space=vmem, size = 0x2000, scoped, tag = 'input window, operand 1']
    #allocation6 [shape = 's32[2]{0}', space=sflag, size = 0x8, scoped, tag = 'scoped memory for tpu_custom_call.1']
    #allocation7 [shape = 'u8[8192]{0}', space=vmem, size = 0x2000, scoped, tag = 'output window, operand 0']
    %7 = vsyncpa [#allocation3], 0
    %s8 = scalar_lea.sflag [#allocation3], 1
    %9 = vsyncpa %s8, 0
    %10 = vsyncpa [#allocation6], 0
    %s11 = scalar_lea.sflag [#allocation6], 1
    %12 = vsyncpa %s11, 0
    %13 = vsyncpa [#allocation4], 0
    %s14 = scalar_lea.sflag [#allocation4], 1
    %15 = vsyncpa %s14, 0
    loop: start=0, step=1, limit=4
    $region2: #{tpu_custom_call.1} parent=1 // loop_pre_header
      _
    $region3: #{tpu_custom_call.1} parent=1 // loop_header
      %s17 = sphi 0, %s21
      %p18 = scmp.ge.s32.totalorder %s17, 4
      %s27 = sphi 0, %s29
      %s30 = sphi 0, %s27
      %s31 = sphi 0, %s30
      %s47 = sphi 0, %s31
      %s53 = sphi 0, %s55
      %s56 = sphi 0, %s53
      %s57 = sphi 0, %s56
      %s73 = sphi 0, %s57
      %s79 = sphi 0, %s81
      %s82 = sphi 0, %s79
      %s83 = sphi 0, %s82
      %s99 = sphi 0, %s83
    $region4: #{tpu_custom_call.1} parent=1 // loop_header_branch
      %20 = sbr.rel (%p18) target = $region8
    $region5: #{tpu_custom_call.1} parent=1 // loop_body
      %s22 = ssub.s32 %s17, 1
      %s23 = ssub.s32 %s17, 2
      %s24 = sadd.s32 %s17, 1
      %s25 = ssub.s32 %s17, %s24
      %p26 = scmp.eq.s32.totalorder %s25, 0
      %s28 = sadd.s32 %s27, 1
      %s29 = scalar_select %p26, %s27, %s28
      %p32 = pneg %p26
      %p33 = scmp.eq.s32.totalorder %s17, 1
      %p34 = por %p32, %p33
      %p35 = scmp.ne.s32.totalorder %s27, %s30
      %p36 = scmp.eq.s32.totalorder %s17, 0
      %p37 = por %p35, %p36
      %p38 = scmp.ne.s32.totalorder %s27, %s30
      %p39 = scmp.eq.s32.totalorder %s22, 1
      %p40 = por %p38, %p39
      %p41 = scmp.ne.s32.totalorder %s30, %s31
      %p42 = scmp.eq.s32.totalorder %s22, 0
      %p43 = por %p41, %p42
      %p44 = scmp.ne.s32.totalorder %s30, %s31
      %p45 = scmp.eq.s32.totalorder %s23, 1
      %p46 = por %p44, %p45
      %p48 = scmp.ne.s32.totalorder %s31, %s47
      %p49 = scmp.eq.s32.totalorder %s23, 0
      %p50 = por %p48, %p49
      %s51 = ssub.s32 %s17, %s24
      %p52 = scmp.eq.s32.totalorder %s51, 0
      %s54 = sadd.s32 %s53, 1
      %s55 = scalar_select %p52, %s53, %s54
      %p58 = pneg %p52
      %p59 = scmp.eq.s32.totalorder %s17, 1
      %p60 = por %p58, %p59
      %p61 = scmp.ne.s32.totalorder %s53, %s56
      %p62 = scmp.eq.s32.totalorder %s17, 0
      %p63 = por %p61, %p62
      %p64 = scmp.ne.s32.totalorder %s53, %s56
      %p65 = scmp.eq.s32.totalorder %s22, 1
      %p66 = por %p64, %p65
      %p67 = scmp.ne.s32.totalorder %s56, %s57
      %p68 = scmp.eq.s32.totalorder %s22, 0
      %p69 = por %p67, %p68
      %p70 = scmp.ne.s32.totalorder %s56, %s57
      %p71 = scmp.eq.s32.totalorder %s23, 1
      %p72 = por %p70, %p71
      %p74 = scmp.ne.s32.totalorder %s57, %s73
      %p75 = scmp.eq.s32.totalorder %s23, 0
      %p76 = por %p74, %p75
      %s77 = ssub.s32 %s17, %s24
      %p78 = scmp.eq.s32.totalorder %s77, 0
      %s80 = sadd.s32 %s79, 1
      %s81 = scalar_select %p78, %s79, %s80
      %p84 = pneg %p78
      %p85 = scmp.eq.s32.totalorder %s17, 1
      %p86 = por %p84, %p85
      %p87 = scmp.ne.s32.totalorder %s79, %s82
      %p88 = scmp.eq.s32.totalorder %s17, 0
      %p89 = por %p87, %p88
      %p90 = scmp.ne.s32.totalorder %s79, %s82
      %p91 = scmp.eq.s32.totalorder %s22, 1
      %p92 = por %p90, %p91
      %p93 = scmp.ne.s32.totalorder %s82, %s83
      %p94 = scmp.eq.s32.totalorder %s22, 0
      %p95 = por %p93, %p94
      %p96 = scmp.ne.s32.totalorder %s82, %s83
      %p97 = scmp.eq.s32.totalorder %s23, 1
      %p98 = por %p96, %p97
      %p100 = scmp.ne.s32.totalorder %s83, %s99
      %p101 = scmp.eq.s32.totalorder %s23, 0
      %p102 = por %p100, %p101
      %p103 = scmp.le.s32.totalorder 1, %s17
      %p104 = scmp.lt.s32.totalorder %s17, 3
      %p105 = pnand %p103, %p104
      %p106 = pneg %p105
      // Predicated region
      $region9: #{tpu_custom_call.1} parent=5 // pred_check
        _
      $region10: #{tpu_custom_call.1} parent=5 // pred_check_branch
        %108 = sbr.rel (%p105) target = $region12
      $region11: #{tpu_custom_call.1} parent=5 // pred_region
        %s109 = ssub.s32 %s17, 1
      $region12: #{tpu_custom_call.1} parent=5 // pred_fallthru
        _
      %p110 = scmp.lt.s32.totalorder %s17, 2
      // Predicated region
      $region13: #{tpu_custom_call.1} parent=5 // pred_check
        %p111 = pneg %p110
      $region14: #{tpu_custom_call.1} parent=5 // pred_check_branch
        %113 = sbr.rel (%p111) target = $region16
      $region15: #{tpu_custom_call.1} parent=5 // pred_region
        // Predicated region
        $region17: #{tpu_custom_call.1} parent=15 // pred_check
          %p114 = pneg %p37
        $region18: #{tpu_custom_call.1} parent=15 // pred_check_branch
          %116 = sbr.rel (%p114) target = $region20
        $region19: #{tpu_custom_call.1} parent=15 // pred_region
          %s117 = sand.u32 %s27, 1
          %s118 = scalar_lea.sflag [#allocation3], %s117
          %s119 = sand.u32 %s27, 1
          %s120 = smul.addr %s119, 8
          %s121 = scalar_lea.vmem [#allocation2], %s120
          %s123 = ssub.s32 128, 128
          %124 = vsyncadd %s118, %s123
          %s125 = smul.addr %s17, 128
          %s126 = scalar_lea.hbm %s0, %s125
          %s128 = sshll.u32 %s121, 4
          %s129 = int_to_ptr.vmem [resolvable:$true] %s128
          %131 = dma.hbm_to_vmem [thread:$0]  %s126, 128, %s129, %s118
        $region20: #{tpu_custom_call.1} parent=15 // pred_fallthru
          _
        // Predicated region
        $region21: #{tpu_custom_call.1} parent=15 // pred_check
          %p132 = pneg %p63
        $region22: #{tpu_custom_call.1} parent=15 // pred_check_branch
          %134 = sbr.rel (%p132) target = $region24
        $region23: #{tpu_custom_call.1} parent=15 // pred_region
          %s135 = sand.u32 %s53, 1
          %s136 = scalar_lea.sflag [#allocation6], %s135
          %s137 = sand.u32 %s53, 1
          %s138 = smul.addr %s137, 8
          %s139 = scalar_lea.vmem [#allocation5], %s138
          %s141 = ssub.s32 128, 128
          %142 = vsyncadd %s136, %s141
          %s143 = smul.addr %s17, 128
          %s144 = scalar_lea.hbm %s1, %s143
          %s146 = sshll.u32 %s139, 4
          %s147 = int_to_ptr.vmem [resolvable:$true] %s146
          %149 = dma.hbm_to_vmem [thread:$0]  %s144, 128, %s147, %s136
        $region24: #{tpu_custom_call.1} parent=15 // pred_fallthru
          _
      $region16: #{tpu_custom_call.1} parent=5 // pred_fallthru
        _
      %p150 = scmp.le.s32.totalorder 1, %s17
      %p151 = scmp.lt.s32.totalorder %s17, 3
      %p152 = pnand %p150, %p151
      %p153 = pneg %p152
      // Predicated region
      $region25: #{tpu_custom_call.1} parent=5 // pred_check
        _
      $region26: #{tpu_custom_call.1} parent=5 // pred_check_branch
        %155 = sbr.rel (%p152) target = $region28
      $region27: #{tpu_custom_call.1} parent=5 // pred_region
        %s156 = ssub.s32 %s17, 1
        %s157 = sand.u32 %s30, 1
        %s158 = scalar_lea.sflag [#allocation3], %s157
        %s159 = sand.u32 %s30, 1
        %s160 = smul.addr %s159, 8
        %s161 = scalar_lea.vmem [#allocation2], %s160
        // Predicated region
        $region29: #{tpu_custom_call.1} parent=27 // pred_check
          %p162 = pneg %p43
        $region30: #{tpu_custom_call.1} parent=27 // pred_check_branch
          %164 = sbr.rel (%p162) target = $region32
        $region31: #{tpu_custom_call.1} parent=27 // pred_region
          %165 = dma.done %s158, 128
        $region32: #{tpu_custom_call.1} parent=27 // pred_fallthru
          _
        %s166 = sand.u32 %s56, 1
        %s167 = scalar_lea.sflag [#allocation6], %s166
        %s168 = sand.u32 %s56, 1
        %s169 = smul.addr %s168, 8
        %s170 = scalar_lea.vmem [#allocation5], %s169
        // Predicated region
        $region33: #{tpu_custom_call.1} parent=27 // pred_check
          %p171 = pneg %p69
        $region34: #{tpu_custom_call.1} parent=27 // pred_check_branch
          %173 = sbr.rel (%p171) target = $region36
        $region35: #{tpu_custom_call.1} parent=27 // pred_region
          %174 = dma.done %s167, 128
        $region36: #{tpu_custom_call.1} parent=27 // pred_fallthru
          _
        %s175 = sand.u32 %s30, 1
        %s176 = scalar_lea.sflag [#allocation3], %s175
        %s177 = sand.u32 %s30, 1
        %s178 = smul.addr %s177, 8
        %s179 = scalar_lea.vmem [#allocation2], %s178
        %p180 = pneg %p43
        %p181 = pneg %p40
        %s182 = sand.u32 %s56, 1
        %s183 = scalar_lea.sflag [#allocation6], %s182
        %s184 = sand.u32 %s56, 1
        %s185 = smul.addr %s184, 8
        %s186 = scalar_lea.vmem [#allocation5], %s185
        %p187 = pneg %p69
        %p188 = pneg %p66
        %p189 = pneg %p95
        %p190 = pneg %p92
        %s191 = sand.u32 %s82, 1
        %s192 = scalar_lea.sflag [#allocation4], %s191
        %s193 = sand.u32 %s82, 1
        %s194 = smul.addr %s193, 8
        %s195 = scalar_lea.vmem [#allocation7], %s194
        %v196 = vld [vmem:[%s161] sm:$0xff]
        %v197 = vld [vmem:[%s170] sm:$0xff]
        %v198 = vand.u32 2147483647, %v196
        %v199 = vsub.f32 0.0, %v198
        %v200 = vmul.f32 %v199, 1.442695
        %v201 = vpow.pop %v200
        %v202 = vadd.f32 %v201, 1.0
        %v203 = vrcp.pop %v202
        %v204 = vmul.f32 %v202, %v203
        %v205 = vsub.f32 2.0, %v204
        %v206 = vmul.f32 %v203, %v205
        %v207 = vmul.f32 %v201, %v206
        %v208 = vmax.f32 %v196, 0.0
        %v209 = vmul.f32 %v196, %v197
        %v210 = vsub.f32 %v208, %v209
        %v211 = vlog2.pop %v202
        %v212 = vmul.f32 %v211, 0.6931472
        %v213 = vadd.f32 %v210, %v212
        %vm214 = vcmp.ge.f32.partialorder %v196, 0.0
        %v215 = vsel %vm214, %v206, %v207
        %v216 = vsel %vm214, %v207, %v206
        %v217 = vsub.f32 %v216, %v215
        %v218 = vmul.f32 %v197, %v217
        %v219 = vadd.f32 %v215, %v218
        %v220 = vmax.f32 %v219, 0.0
        %v221 = vrsqrt.pop %v220
        %v222 = vmul.f32 %v220, %v221
        %vm223 = vcmp.eq.f32.partialorder %v220, inf
        %v224 = vsel %vm223, %v220, %v222
        %vm225 = vcmp.eq.f32.partialorder %v220, 0.0
        %v226 = vand.u32 %v220, 2147483648
        %v227 = vsel %vm225, %v226, %v224
        %v228 = vmul.f32 %v220, %v227
        %v229 = vmul.f32 %v213, %v228
        %v230 = vmul.f32 %v197, -0.5
        %v231 = vadd.f32 %v230, 0.75
        %v232 = vmul.f32 %v229, %v231
        %v233 = vadd.f32 %v232, 0.0
        %v234 = vadd.f32 %v233, 0.0
        %235 = vst [vmem:[%s195] sm:$0xff] %v234
        %s236 = sand.u32 %s82, 1
        %s237 = scalar_lea.sflag [#allocation4], %s236
        %s238 = sand.u32 %s82, 1
        %s239 = smul.addr %s238, 8
        %s240 = scalar_lea.vmem [#allocation7], %s239
        // Predicated region
        $region37: #{tpu_custom_call.1} parent=27 // pred_check
          %p241 = pneg %p92
        $region38: #{tpu_custom_call.1} parent=27 // pred_check_branch
          %243 = sbr.rel (%p241) target = $region40
        $region39: #{tpu_custom_call.1} parent=27 // pred_region
          %s245 = ssub.s32 128, 128
          %246 = vsyncadd %s237, %s245
          %s247 = smul.addr %s22, 128
          %s248 = scalar_lea.hbm %s2, %s247
          %s250 = sshll.u32 %s240, 4
          %s251 = int_to_ptr.vmem [resolvable:$true] %s250
          %253 = dma.vmem_to_hbm [thread:$0]  %s251, 128, %s248, %s237
        $region40: #{tpu_custom_call.1} parent=27 // pred_fallthru
          _
      $region28: #{tpu_custom_call.1} parent=5 // pred_fallthru
        _
      %p254 = scmp.le.s32.totalorder 2, %s17
      // Predicated region
      $region41: #{tpu_custom_call.1} parent=5 // pred_check
        %p255 = pneg %p254
      $region42: #{tpu_custom_call.1} parent=5 // pred_check_branch
        %257 = sbr.rel (%p255) target = $region44
      $region43: #{tpu_custom_call.1} parent=5 // pred_region
        %s258 = ssub.s32 %s17, 2
        // Predicated region
        $region45: #{tpu_custom_call.1} parent=43 // pred_check
          %p259 = pneg %p98
        $region46: #{tpu_custom_call.1} parent=43 // pred_check_branch
          %261 = sbr.rel (%p259) target = $region48
        $region47: #{tpu_custom_call.1} parent=43 // pred_region
          %s262 = sand.u32 %s83, 1
          %s263 = scalar_lea.sflag [#allocation4], %s262
          %s264 = sand.u32 %s83, 1
          %s265 = smul.addr %s264, 8
          %s266 = scalar_lea.vmem [#allocation7], %s265
          %267 = dma.done %s263, 128
        $region48: #{tpu_custom_call.1} parent=43 // pred_fallthru
          _
      $region44: #{tpu_custom_call.1} parent=5 // pred_fallthru
        _
    $region6: #{tpu_custom_call.1} parent=1 // loop_footer
      %s21 = sadd.s32 1, %s17
    $region7: #{tpu_custom_call.1} parent=1 // loop_footer_branch
      %16 = sbr.rel target = $region3
    $region8: #{tpu_custom_call.1} parent=1 // loop_exit
      _
    %268 = vsyncpa [#allocation3], 1
    %s269 = scalar_lea.sflag [#allocation3], 1
    %270 = vsyncpa %s269, 1
    %271 = vsyncpa [#allocation6], 1
    %s272 = scalar_lea.sflag [#allocation6], 1
    %273 = vsyncpa %s272, 1
    %274 = vsyncpa [#allocation4], 1
    %s275 = scalar_lea.sflag [#allocation4], 1
    %276 = vsyncpa %s275, 1

</llo_original>
